<compile_context>
chip_gen: v5e
topology: v5e:2x2
jax: 0.10.0
libtpu: 0.0.40
codegen_flags: <defaults>
</compile_context>

<pallas_src>
import jax
import jax.numpy as jnp
from jax.experimental import pallas as pl
from jax.experimental.pallas import tpu as pltpu

NUM_Z_CHANNELS = 32
NUM_ENCODER_CHANNELS = 64
DIMS = (NUM_Z_CHANNELS,
        NUM_ENCODER_CHANNELS,
        NUM_ENCODER_CHANNELS // 2,
        NUM_ENCODER_CHANNELS // 4)
BN_EPS = 1e-5


def _fc_bn_relu(x, w_bf16, gamma, beta, inv_b):
    """Linear (bias-free) -> BatchNorm1d (training-mode batch stats) -> ReLU.

    The Linear bias is omitted on purpose: BN's batch-mean subtraction cancels
    it exactly, so it never needs to be loaded or added. `x` may already be
    bf16 (first layer) -- the astype is then a trace-time no-op.
    """
    y = jnp.dot(x.astype(jnp.bfloat16), w_bf16,
                preferred_element_type=jnp.float32)                  # (B, out) f32
    # One-pass batch statistics (f32 accumulators).
    s = jnp.sum(y, axis=0, keepdims=True)                            # (1, out)
    ss = jnp.sum(y * y, axis=0, keepdims=True)                       # (1, out)
    mean = s * inv_b
    var = jnp.maximum(ss * inv_b - mean * mean, 0.0)                 # biased var
    # Fold BN affine into a single per-feature scale/shift.
    scale = gamma * jax.lax.rsqrt(var + BN_EPS)                      # (1, out)
    shift = beta - mean * scale
    return jnp.maximum(y * scale + shift, 0.0)


def discriminator_z_kernel(z_ref,
                           w1_ref, g1_ref, be1_ref,
                           w2_ref, g2_ref, be2_ref,
                           w3_ref, g3_ref, be3_ref,
                           w4_ref, b4_ref,
                           out_ref):
    inv_b = jnp.float32(1.0 / z_ref.shape[0])
    x = _fc_bn_relu(z_ref[...], w1_ref[...], g1_ref[...], be1_ref[...], inv_b)
    x = _fc_bn_relu(x, w2_ref[...], g2_ref[...], be2_ref[...], inv_b)
    x = _fc_bn_relu(x, w3_ref[...], g3_ref[...], be3_ref[...], inv_b)
    # Final Linear(16 -> 1) computed transposed: (1,16) . (B,16)^T -> (1, B),
    # i.e. batch rows packed into lanes (lane-dense store, 4 B/row of HBM).
    row = jax.lax.dot_general(
        w4_ref[...], x.astype(jnp.bfloat16),
        dimension_numbers=(((1,), (1,)), ((), ())),
        preferred_element_type=jnp.float32) + b4_ref[0, 0]
    out_ref[...] = row.astype(out_ref.dtype)


def init_params(key):
    """Deterministic parameters following the PyTorch __init__ shapes (PyTorch
    layout: W (out, in), b (out,)). BN gamma/beta are randomized (instead of
    the default 1/0) so the affine broadcasts are actually exercised."""
    keys = jax.random.split(key, 14)
    ki = 0
    layers = []
    for in_dim, out_dim in zip(DIMS[:-1], DIMS[1:]):
        bound = 1.0 / float(in_dim) ** 0.5
        w = jax.random.uniform(keys[ki], (out_dim, in_dim), jnp.float32, -bound, bound); ki += 1
        b = jax.random.uniform(keys[ki], (out_dim,), jnp.float32, -bound, bound);        ki += 1
        g = 1.0 + 0.1 * jax.random.normal(keys[ki], (out_dim,), jnp.float32);            ki += 1
        be = 0.1 * jax.random.normal(keys[ki], (out_dim,), jnp.float32);                 ki += 1
        layers.append((w, b, g, be))
    in_dim = DIMS[-1]
    bound = 1.0 / float(in_dim) ** 0.5
    w4 = jax.random.uniform(keys[ki], (1, in_dim), jnp.float32, -bound, bound); ki += 1
    b4 = jax.random.uniform(keys[ki], (1,), jnp.float32, -bound, bound)
    return layers, (w4, b4)


def pack_kernel_params(layers, final):
    """Kernel operand layout:
      - hidden weights transposed to (in, out), pre-cast to bf16 (MXU-native)
      - hidden Linear biases dropped (exactly cancelled by training-mode BN)
      - gamma/beta as (1, out) f32 for lane-wise broadcast
      - final weight kept in its natural (1, 16) PyTorch layout as bf16 (used
        as the LHS of the transposed final dot), final bias as a (1, 1) f32
        SMEM scalar.
    """
    ops = []
    for (w, _b, g, be) in layers:
        ops += [w.T.astype(jnp.bfloat16), g[None, :], be[None, :]]
    w4, b4 = final
    ops += [w4.astype(jnp.bfloat16), b4.reshape(1, 1).astype(jnp.float32)]
    return ops


def _vmem_limit_bytes(batch):
    # Generation-aware cap: never request more than ~75% of physical VMEM
    # (v7x has only 64 MiB per TensorCore; v5e/v6e have 128 MiB).
    try:
        phys = int(pltpu.get_tpu_info().vmem_capacity_bytes)
    except Exception:
        phys = 64 * 2**20          # conservative fallback (v7x per-TC VMEM)
    cap = int(0.75 * phys)
    # Usage is dominated by per-row activations: bf16 input (64 B) + f32
    # hidden activations (448 B) + bf16 matmul copies (~288 B) + headroom.
    need = max(16 * 2**20, batch * 4096)
    return int(min(cap, need))


def discriminator_z(z, kernel_params):
    B = z.shape[0]
    vmem = pl.BlockSpec(memory_space=pltpu.MemorySpace.VMEM)
    smem = pl.BlockSpec(memory_space=pltpu.MemorySpace.SMEM)

    # Advisory cost hint: this is a few-microsecond, latency-bound call
    # (K dims of 16..64 leave the MXU nearly idle).
    flops = 2 * B * sum(i * o for i, o in zip(DIMS + (DIMS[-1],), DIMS[1:] + (1,)))
    param_bytes = sum(int(p.size) * p.dtype.itemsize for p in kernel_params)
    bytes_accessed = B * NUM_Z_CHANNELS * 2 + B * 4 + param_bytes
    transcendentals = sum(DIMS[1:])   # one rsqrt per BN feature

    out_row = pl.pallas_call(
        discriminator_z_kernel,
        out_shape=jax.ShapeDtypeStruct((1, B), jnp.float32),
        in_specs=[vmem] * 11 + [smem],      # z, 3x(w,g,be), w4 in VMEM; b4 scalar in SMEM
        out_specs=vmem,
        compiler_params=pltpu.CompilerParams(
            vmem_limit_bytes=_vmem_limit_bytes(B)),
        cost_estimate=pl.CostEstimate(
            flops=flops,
            transcendentals=transcendentals,
            bytes_accessed=bytes_accessed),
    )(z.astype(jnp.bfloat16), *kernel_params)
    # (1, B) rows-into-lanes -> (B, 1); only B*4 bytes touched here.
    return out_row.reshape(B, 1)


def discriminator_z_ref(z, layers, final):
    """Pure-JAX reference: the exact PyTorch forward (biases included,
    training-mode BN with biased variance) evaluated at the kernel's matmul
    precision (bf16 operands, f32 accumulation)."""
    def bf16(a):
        return a.astype(jnp.bfloat16).astype(jnp.float32)

    x = z.astype(jnp.float32)
    for (w, b, g, be) in layers:
        y = bf16(x) @ bf16(w.T) + b[None, :]
        mean = jnp.mean(y, axis=0, keepdims=True)
        var = jnp.mean((y - mean) ** 2, axis=0, keepdims=True)
        x = jnp.maximum((y - mean) / jnp.sqrt(var + BN_EPS) * g[None, :] + be[None, :], 0.0)
    w4, b4 = final
    return bf16(x) @ bf16(w4.T) + b4[None, :]


if __name__ == "__main__":
    key = jax.random.PRNGKey(0)
    k_z, k_p = jax.random.split(key)

    B = 8
    z = jax.random.normal(k_z, (B, NUM_Z_CHANNELS), jnp.float32)
    layers, final = init_params(k_p)
    kparams = pack_kernel_params(layers, final)

    out = jax.block_until_ready(discriminator_z(z, kparams))
    ref = discriminator_z_ref(z, layers, final)

    assert out.shape == (B, 1), out.shape
    # bf16 matmul operands (f32 accumulate) -> slightly looser tolerance than pure f32.
    assert jnp.allclose(out, ref, atol=5e-3, rtol=5e-3), (out, ref)

    print("KERNEL_OK")
</pallas_src>

<mosaic_0001>
module attributes {stable_mosaic.version = 11 : i64} {
  func.func @discriminator_z_kernel(%arg0: memref<8x32xbf16, #tpu.memory_space<vmem>>, %arg1: memref<32x64xbf16, #tpu.memory_space<vmem>>, %arg2: memref<1x64xf32, #tpu.memory_space<vmem>>, %arg3: memref<1x64xf32, #tpu.memory_space<vmem>>, %arg4: memref<64x32xbf16, #tpu.memory_space<vmem>>, %arg5: memref<1x32xf32, #tpu.memory_space<vmem>>, %arg6: memref<1x32xf32, #tpu.memory_space<vmem>>, %arg7: memref<32x16xbf16, #tpu.memory_space<vmem>>, %arg8: memref<1x16xf32, #tpu.memory_space<vmem>>, %arg9: memref<1x16xf32, #tpu.memory_space<vmem>>, %arg10: memref<1x16xbf16, #tpu.memory_space<vmem>>, %arg11: memref<1x1xf32, #tpu.memory_space<smem>>, %arg12: memref<1x8xf32, #tpu.memory_space<vmem>>) attributes {dimension_semantics = [], scalar_prefetch = 0 : i64, scratch_operands = 0 : i64, tpu.core_type = #tpu.core_type<tc>} {
    %c0 = arith.constant 0 : index
    %c0_0 = arith.constant 0 : index
    %0 = vector.load %arg0[%c0, %c0_0] : memref<8x32xbf16, #tpu.memory_space<vmem>>, vector<8x32xbf16>
    %c0_1 = arith.constant 0 : index
    %c0_2 = arith.constant 0 : index
    %1 = vector.load %arg1[%c0_1, %c0_2] : memref<32x64xbf16, #tpu.memory_space<vmem>>, vector<32x64xbf16>
    %c0_3 = arith.constant 0 : index
    %c0_4 = arith.constant 0 : index
    %2 = vector.load %arg2[%c0_3, %c0_4] : memref<1x64xf32, #tpu.memory_space<vmem>>, vector<1x64xf32>
    %c0_5 = arith.constant 0 : index
    %c0_6 = arith.constant 0 : index
    %3 = vector.load %arg3[%c0_5, %c0_6] : memref<1x64xf32, #tpu.memory_space<vmem>>, vector<1x64xf32>
    %cst = arith.constant dense<0.000000e+00> : vector<8x64xf32>
    %4 = tpu.matmul %0, %1, %cst {dimension_numbers = #tpu.dot_dimension_numbers<[1], [0], [0], [1], [0, 0, 1, 1], [], []>} : vector<8x32xbf16>, vector<32x64xbf16>, vector<8x64xf32> -> vector<8x64xf32>
    %cst_7 = arith.constant dense<0.000000e+00> : vector<64xf32>
    %5 = vector.multi_reduction <add>, %4, %cst_7 [0] : vector<8x64xf32> to vector<64xf32>
    %6 = vector.shape_cast %5 : vector<64xf32> to vector<1x64xf32>
    %7 = arith.mulf %4, %4 : vector<8x64xf32>
    %cst_8 = arith.constant dense<0.000000e+00> : vector<64xf32>
    %8 = vector.multi_reduction <add>, %7, %cst_8 [0] : vector<8x64xf32> to vector<64xf32>
    %9 = vector.shape_cast %8 : vector<64xf32> to vector<1x64xf32>
    %cst_9 = arith.constant 1.250000e-01 : f32
    %10 = vector.broadcast %cst_9 : f32 to vector<1x64xf32>
    %11 = arith.mulf %6, %10 : vector<1x64xf32>
    %cst_10 = arith.constant 1.250000e-01 : f32
    %12 = vector.broadcast %cst_10 : f32 to vector<1x64xf32>
    %13 = arith.mulf %9, %12 : vector<1x64xf32>
    %14 = arith.mulf %11, %11 : vector<1x64xf32>
    %15 = arith.subf %13, %14 : vector<1x64xf32>
    %cst_11 = arith.constant 0.000000e+00 : f32
    %16 = vector.broadcast %cst_11 : f32 to vector<1x64xf32>
    %17 = arith.maximumf %15, %16 : vector<1x64xf32>
    %cst_12 = arith.constant 9.99999974E-6 : f32
    %18 = vector.broadcast %cst_12 : f32 to vector<1x64xf32>
    %19 = arith.addf %17, %18 : vector<1x64xf32>
    %20 = math.rsqrt %19 : vector<1x64xf32>
    %21 = arith.mulf %2, %20 : vector<1x64xf32>
    %22 = arith.mulf %11, %21 : vector<1x64xf32>
    %23 = arith.subf %3, %22 : vector<1x64xf32>
    %24 = vector.broadcast %21 : vector<1x64xf32> to vector<8x64xf32>
    %25 = arith.mulf %4, %24 : vector<8x64xf32>
    %26 = vector.broadcast %23 : vector<1x64xf32> to vector<8x64xf32>
    %27 = arith.addf %25, %26 : vector<8x64xf32>
    %cst_13 = arith.constant 0.000000e+00 : f32
    %28 = vector.broadcast %cst_13 : f32 to vector<8x64xf32>
    %29 = arith.maximumf %27, %28 : vector<8x64xf32>
    %c0_14 = arith.constant 0 : index
    %c0_15 = arith.constant 0 : index
    %30 = vector.load %arg4[%c0_14, %c0_15] : memref<64x32xbf16, #tpu.memory_space<vmem>>, vector<64x32xbf16>
    %c0_16 = arith.constant 0 : index
    %c0_17 = arith.constant 0 : index
    %31 = vector.load %arg5[%c0_16, %c0_17] : memref<1x32xf32, #tpu.memory_space<vmem>>, vector<1x32xf32>
    %c0_18 = arith.constant 0 : index
    %c0_19 = arith.constant 0 : index
    %32 = vector.load %arg6[%c0_18, %c0_19] : memref<1x32xf32, #tpu.memory_space<vmem>>, vector<1x32xf32>
    %33 = arith.truncf %29 : vector<8x64xf32> to vector<8x64xbf16>
    %cst_20 = arith.constant dense<0.000000e+00> : vector<8x32xf32>
    %34 = tpu.matmul %33, %30, %cst_20 {dimension_numbers = #tpu.dot_dimension_numbers<[1], [0], [0], [1], [0, 0, 1, 1], [], []>} : vector<8x64xbf16>, vector<64x32xbf16>, vector<8x32xf32> -> vector<8x32xf32>
    %cst_21 = arith.constant dense<0.000000e+00> : vector<32xf32>
    %35 = vector.multi_reduction <add>, %34, %cst_21 [0] : vector<8x32xf32> to vector<32xf32>
    %36 = vector.shape_cast %35 : vector<32xf32> to vector<1x32xf32>
    %37 = arith.mulf %34, %34 : vector<8x32xf32>
    %cst_22 = arith.constant dense<0.000000e+00> : vector<32xf32>
    %38 = vector.multi_reduction <add>, %37, %cst_22 [0] : vector<8x32xf32> to vector<32xf32>
    %39 = vector.shape_cast %38 : vector<32xf32> to vector<1x32xf32>
    %cst_23 = arith.constant 1.250000e-01 : f32
    %40 = vector.broadcast %cst_23 : f32 to vector<1x32xf32>
    %41 = arith.mulf %36, %40 : vector<1x32xf32>
    %cst_24 = arith.constant 1.250000e-01 : f32
    %42 = vector.broadcast %cst_24 : f32 to vector<1x32xf32>
    %43 = arith.mulf %39, %42 : vector<1x32xf32>
    %44 = arith.mulf %41, %41 : vector<1x32xf32>
    %45 = arith.subf %43, %44 : vector<1x32xf32>
    %cst_25 = arith.constant 0.000000e+00 : f32
    %46 = vector.broadcast %cst_25 : f32 to vector<1x32xf32>
    %47 = arith.maximumf %45, %46 : vector<1x32xf32>
    %cst_26 = arith.constant 9.99999974E-6 : f32
    %48 = vector.broadcast %cst_26 : f32 to vector<1x32xf32>
    %49 = arith.addf %47, %48 : vector<1x32xf32>
    %50 = math.rsqrt %49 : vector<1x32xf32>
    %51 = arith.mulf %31, %50 : vector<1x32xf32>
    %52 = arith.mulf %41, %51 : vector<1x32xf32>
    %53 = arith.subf %32, %52 : vector<1x32xf32>
    %54 = vector.broadcast %51 : vector<1x32xf32> to vector<8x32xf32>
    %55 = arith.mulf %34, %54 : vector<8x32xf32>
    %56 = vector.broadcast %53 : vector<1x32xf32> to vector<8x32xf32>
    %57 = arith.addf %55, %56 : vector<8x32xf32>
    %cst_27 = arith.constant 0.000000e+00 : f32
    %58 = vector.broadcast %cst_27 : f32 to vector<8x32xf32>
    %59 = arith.maximumf %57, %58 : vector<8x32xf32>
    %c0_28 = arith.constant 0 : index
    %c0_29 = arith.constant 0 : index
    %60 = vector.load %arg7[%c0_28, %c0_29] : memref<32x16xbf16, #tpu.memory_space<vmem>>, vector<32x16xbf16>
    %c0_30 = arith.constant 0 : index
    %c0_31 = arith.constant 0 : index
    %61 = vector.load %arg8[%c0_30, %c0_31] : memref<1x16xf32, #tpu.memory_space<vmem>>, vector<1x16xf32>
    %c0_32 = arith.constant 0 : index
    %c0_33 = arith.constant 0 : index
    %62 = vector.load %arg9[%c0_32, %c0_33] : memref<1x16xf32, #tpu.memory_space<vmem>>, vector<1x16xf32>
    %63 = arith.truncf %59 : vector<8x32xf32> to vector<8x32xbf16>
    %cst_34 = arith.constant dense<0.000000e+00> : vector<8x16xf32>
    %64 = tpu.matmul %63, %60, %cst_34 {dimension_numbers = #tpu.dot_dimension_numbers<[1], [0], [0], [1], [0, 0, 1, 1], [], []>} : vector<8x32xbf16>, vector<32x16xbf16>, vector<8x16xf32> -> vector<8x16xf32>
    %cst_35 = arith.constant dense<0.000000e+00> : vector<16xf32>
    %65 = vector.multi_reduction <add>, %64, %cst_35 [0] : vector<8x16xf32> to vector<16xf32>
    %66 = vector.shape_cast %65 : vector<16xf32> to vector<1x16xf32>
    %67 = arith.mulf %64, %64 : vector<8x16xf32>
    %cst_36 = arith.constant dense<0.000000e+00> : vector<16xf32>
    %68 = vector.multi_reduction <add>, %67, %cst_36 [0] : vector<8x16xf32> to vector<16xf32>
    %69 = vector.shape_cast %68 : vector<16xf32> to vector<1x16xf32>
    %cst_37 = arith.constant 1.250000e-01 : f32
    %70 = vector.broadcast %cst_37 : f32 to vector<1x16xf32>
    %71 = arith.mulf %66, %70 : vector<1x16xf32>
    %cst_38 = arith.constant 1.250000e-01 : f32
    %72 = vector.broadcast %cst_38 : f32 to vector<1x16xf32>
    %73 = arith.mulf %69, %72 : vector<1x16xf32>
    %74 = arith.mulf %71, %71 : vector<1x16xf32>
    %75 = arith.subf %73, %74 : vector<1x16xf32>
    %cst_39 = arith.constant 0.000000e+00 : f32
    %76 = vector.broadcast %cst_39 : f32 to vector<1x16xf32>
    %77 = arith.maximumf %75, %76 : vector<1x16xf32>
    %cst_40 = arith.constant 9.99999974E-6 : f32
    %78 = vector.broadcast %cst_40 : f32 to vector<1x16xf32>
    %79 = arith.addf %77, %78 : vector<1x16xf32>
    %80 = math.rsqrt %79 : vector<1x16xf32>
    %81 = arith.mulf %61, %80 : vector<1x16xf32>
    %82 = arith.mulf %71, %81 : vector<1x16xf32>
    %83 = arith.subf %62, %82 : vector<1x16xf32>
    %84 = vector.broadcast %81 : vector<1x16xf32> to vector<8x16xf32>
    %85 = arith.mulf %64, %84 : vector<8x16xf32>
    %86 = vector.broadcast %83 : vector<1x16xf32> to vector<8x16xf32>
    %87 = arith.addf %85, %86 : vector<8x16xf32>
    %cst_41 = arith.constant 0.000000e+00 : f32
    %88 = vector.broadcast %cst_41 : f32 to vector<8x16xf32>
    %89 = arith.maximumf %87, %88 : vector<8x16xf32>
    %c0_42 = arith.constant 0 : index
    %c0_43 = arith.constant 0 : index
    %90 = vector.load %arg10[%c0_42, %c0_43] : memref<1x16xbf16, #tpu.memory_space<vmem>>, vector<1x16xbf16>
    %91 = arith.truncf %89 : vector<8x16xf32> to vector<8x16xbf16>
    %cst_44 = arith.constant dense<0.000000e+00> : vector<1x8xf32>
    %92 = tpu.matmul %90, %91, %cst_44 {dimension_numbers = #tpu.dot_dimension_numbers<[1], [1], [0], [0], [0, 0, 1, 0], [], []>} : vector<1x16xbf16>, vector<8x16xbf16>, vector<1x8xf32> -> vector<1x8xf32>
    %c0_45 = arith.constant 0 : index
    %c0_46 = arith.constant 0 : index
    %93 = memref.load %arg11[%c0_45, %c0_46] : memref<1x1xf32, #tpu.memory_space<smem>>
    %94 = vector.broadcast %93 : f32 to vector<1x8xf32>
    %95 = arith.addf %92, %94 : vector<1x8xf32>
    %c0_47 = arith.constant 0 : index
    %c0_48 = arith.constant 0 : index
    %96 = vector.load %arg12[%c0_47, %c0_48] : memref<1x8xf32, #tpu.memory_space<vmem>>, vector<1x8xf32>
    tpu.vector_store %arg12[%c0_47, %c0_48], %95 {strides = array<i32>} : memref<1x8xf32, #tpu.memory_space<vmem>>, vector<1x8xf32>,
    return
  }
}

</mosaic_0001>

<llo_original>
// kernel: tpu_custom_call.1
$region0: #{tpu_custom_call.1}
  #allocation0 [shape = 'u32[]', space=smem, size = 0x4, offset = 0x4, fixed_abs, tag = 'smem constant byte address 0x4 - core index']
  #allocation1 [shape = 'u32[72,128]{1,0:T(1,128)}', space=vmem, size = 0x9000, scoped, tag = 'internal scratch']
  #allocation2 [shape = 'f32[1,1]{1,0:T(1,128)S(6)}', space=smem, size = 0x200, scoped, tag = 'scoped memory for tpu_custom_call.1']
  %s0 = inlined_call_operand.vmem [shape: bf16[8,32], index: 0, kind: input, shape index: {}]
  %s1 = inlined_call_operand.vmem [shape: bf16[32,64], index: 1, kind: input, shape index: {}]
  %s2 = inlined_call_operand.vmem [shape: f32[1,64], index: 2, kind: input, shape index: {}]
  %s3 = inlined_call_operand.vmem [shape: f32[1,64], index: 3, kind: input, shape index: {}]
  %s4 = inlined_call_operand.vmem [shape: bf16[64,32], index: 4, kind: input, shape index: {}]
  %s5 = inlined_call_operand.vmem [shape: f32[1,32], index: 5, kind: input, shape index: {}]
  %s6 = inlined_call_operand.vmem [shape: f32[1,32], index: 6, kind: input, shape index: {}]
  %s7 = inlined_call_operand.vmem [shape: bf16[32,16], index: 7, kind: input, shape index: {}]
  %s8 = inlined_call_operand.vmem [shape: f32[1,16], index: 8, kind: input, shape index: {}]
  %s9 = inlined_call_operand.vmem [shape: f32[1,16], index: 9, kind: input, shape index: {}]
  %s10 = inlined_call_operand.vmem [shape: bf16[1,16], index: 10, kind: input, shape index: {}]
  %s11 = inlined_call_operand.<no memory space> [shape: f32[1,1], index: 11, kind: input, shape index: {}]
  %s12 = inlined_call_operand.hbm [shape: f32[1,8], index: 12, kind: output, shape index: {}]
  %s13 = sld [smem:[#allocation0]]
  $region58: #{tpu_custom_call.1} parent=0
    _
  %s15 = ssub.s32 1, %s13
  %s16 = scalar_select 0, %s15, %s13
  %17 = sst [smem:[#allocation2]] %s11
  $region1: #{tpu_custom_call.1} parent=0
    #allocation3 [shape = 'u8[512]{0}', space=vmem, size = 0x400, scoped, tag = 'output window, operand 0, single buffered']
    #allocation4 [shape = 's32[1]{0}', space=sflag, size = 0x4, scoped, tag = 'scoped memory for tpu_custom_call.1']
    %18 = vsyncpa [#allocation4], 0
    // Predicated region
    $region2: #{tpu_custom_call.1} parent=1 // pred_check
      _
    $region3: #{tpu_custom_call.1} parent=1 // pred_check_branch
      %20 = sbr.rel (0) target = $region5
    $region4: #{tpu_custom_call.1} parent=1 // pred_region
      _
    $region5: #{tpu_custom_call.1} parent=1 // pred_fallthru
      _
    // Predicated region
    $region6: #{tpu_custom_call.1} parent=1 // pred_check
      _
    $region7: #{tpu_custom_call.1} parent=1 // pred_check_branch
      %22 = sbr.rel (0) target = $region9
    $region8: #{tpu_custom_call.1} parent=1 // pred_region
      _
    $region9: #{tpu_custom_call.1} parent=1 // pred_fallthru
      _
    // Predicated region
    $region10: #{tpu_custom_call.1} parent=1 // pred_check
      _
    $region11: #{tpu_custom_call.1} parent=1 // pred_check_branch
      %24 = sbr.rel (0) target = $region13
    $region12: #{tpu_custom_call.1} parent=1 // pred_region
      _
    $region13: #{tpu_custom_call.1} parent=1 // pred_fallthru
      _
    // Predicated region
    $region14: #{tpu_custom_call.1} parent=1 // pred_check
      _
    $region15: #{tpu_custom_call.1} parent=1 // pred_check_branch
      %26 = sbr.rel (0) target = $region17
    $region16: #{tpu_custom_call.1} parent=1 // pred_region
      _
    $region17: #{tpu_custom_call.1} parent=1 // pred_fallthru
      _
    // Predicated region
    $region18: #{tpu_custom_call.1} parent=1 // pred_check
      _
    $region19: #{tpu_custom_call.1} parent=1 // pred_check_branch
      %28 = sbr.rel (0) target = $region21
    $region20: #{tpu_custom_call.1} parent=1 // pred_region
      _
    $region21: #{tpu_custom_call.1} parent=1 // pred_fallthru
      _
    // Predicated region
    $region22: #{tpu_custom_call.1} parent=1 // pred_check
      _
    $region23: #{tpu_custom_call.1} parent=1 // pred_check_branch
      %30 = sbr.rel (0) target = $region25
    $region24: #{tpu_custom_call.1} parent=1 // pred_region
      _
    $region25: #{tpu_custom_call.1} parent=1 // pred_fallthru
      _
    // Predicated region
    $region26: #{tpu_custom_call.1} parent=1 // pred_check
      _
    $region27: #{tpu_custom_call.1} parent=1 // pred_check_branch
      %32 = sbr.rel (0) target = $region29
    $region28: #{tpu_custom_call.1} parent=1 // pred_region
      _
    $region29: #{tpu_custom_call.1} parent=1 // pred_fallthru
      _
    // Predicated region
    $region30: #{tpu_custom_call.1} parent=1 // pred_check
      _
    $region31: #{tpu_custom_call.1} parent=1 // pred_check_branch
      %34 = sbr.rel (0) target = $region33
    $region32: #{tpu_custom_call.1} parent=1 // pred_region
      _
    $region33: #{tpu_custom_call.1} parent=1 // pred_fallthru
      _
    // Predicated region
    $region34: #{tpu_custom_call.1} parent=1 // pred_check
      _
    $region35: #{tpu_custom_call.1} parent=1 // pred_check_branch
      %36 = sbr.rel (0) target = $region37
    $region36: #{tpu_custom_call.1} parent=1 // pred_region
      _
    $region37: #{tpu_custom_call.1} parent=1 // pred_fallthru
      _
    // Predicated region
    $region38: #{tpu_custom_call.1} parent=1 // pred_check
      _
    $region39: #{tpu_custom_call.1} parent=1 // pred_check_branch
      %38 = sbr.rel (0) target = $region41
    $region40: #{tpu_custom_call.1} parent=1 // pred_region
      _
    $region41: #{tpu_custom_call.1} parent=1 // pred_fallthru
      _
    // Predicated region
    $region42: #{tpu_custom_call.1} parent=1 // pred_check
      _
    $region43: #{tpu_custom_call.1} parent=1 // pred_check_branch
      %40 = sbr.rel (0) target = $region45
    $region44: #{tpu_custom_call.1} parent=1 // pred_region
      _
    $region45: #{tpu_custom_call.1} parent=1 // pred_fallthru
      _
    // Predicated region
    $region46: #{tpu_custom_call.1} parent=1 // pred_check
      _
    $region47: #{tpu_custom_call.1} parent=1 // pred_check_branch
      %42 = sbr.rel (0) target = $region49
    $region48: #{tpu_custom_call.1} parent=1 // pred_region
      _
    $region49: #{tpu_custom_call.1} parent=1 // pred_fallthru
      _
    %v44 = vld [vmem:[%s0] sm:$0xf]
    %v45 = vld [vmem:[%s1] sm:$0xf]
    %v46 = vld [vmem:[%s1 + $0x4] sm:$0xf]
    %v47 = vld [vmem:[%s1 + $0x8] sm:$0xf]
    %v48 = vld [vmem:[%s1 + $0xc] sm:$0xf]
    %v49 = vld [vmem:[%s2] sm:$0x1]
    %v50 = vld [vmem:[%s3] sm:$0x1]
    %v55 = vunpack.c.l.b16 %v45
    %v56 = vunpack.c.l.b16 %v46
    %v57 = vunpack.c.l.b16 %v47
    %v58 = vunpack.c.l.b16 %v48
    %v59 = vpack.c.b16 %v56, %v55
    %v60 = vpack.c.b16 %v58, %v57
    %vm63 = vcmask 261120
    %v65 = vsel %vm63, %v44, 0
    %67 = vmatpush.bf16.msra.mxu0 0
    %68 = vmatpush.bf16.msra.mxu0 0
    %69 = vmatpush.bf16.msra.mxu0 0
    %70 = vmatpush.bf16.msra.mxu0 0
    %71 = vmatpush.bf16.msra.mxu0 0
    %72 = vmatpush.bf16.msra.mxu0 0
    %73 = vmatpush.bf16.msra.mxu0 %v60
    %74 = vmatpush.bf16.msra.mxu0 %v59
    %75 = vmatmul.bf16.gmra.mxu0 %v65
    %v76 = vpop.f32.mrf.mxu0
    %v77 = vadd.f32 0.0, %v76
    %v78 = vpop.f32.mrf.mxu0
    %79 = vdwg.mxu0
    %vm80 = vcmask 523264
    %v81 = vsel %vm80, %v77, 0.0
    %v82 = vrot.slane %v81, 4
    %v83 = vadd.f32 %v81, %v82
    %v84 = vrot.slane %v83, 2
    %v85 = vadd.f32 %v83, %v84
    %v86 = vrot.slane %v85, 1
    %v87 = vadd.f32 %v85, %v86
    %v88 = vmul.f32 %v77, %v77
    %v89 = vsel %vm80, %v88, 0.0
    %v90 = vrot.slane %v89, 4
    %v91 = vadd.f32 %v89, %v90
    %v92 = vrot.slane %v91, 2
    %v93 = vadd.f32 %v91, %v92
    %v94 = vrot.slane %v93, 1
    %v95 = vadd.f32 %v93, %v94
    %v96 = vmul.f32 %v87, 0.125
    %v97 = vmul.f32 %v95, 0.125
    %v98 = vmul.f32 %v96, %v96
    %v99 = vsub.f32 %v97, %v98
    %v100 = vmax.f32 %v99, 0.0
    %v101 = vadd.f32 %v100, 1e-05
    %v102 = vrsqrt.pop %v101
    %v103 = vmul.f32 %v102, %v101
    %v104 = vmul.f32 %v103, %v102
    %v105 = vmul.f32 0.5, %v104
    %v106 = vsub.f32 1.5, %v105
    %v107 = vmul.f32 %v102, %v106
    %vm108 = vweird.f32 %v101
    %vm109 = vweird.f32 %v102
    %vm110 = vmor %vm108, %vm109
    %v111 = vsel %vm110, %v102, %v107
    %v112 = vmul.f32 %v49, %v111
    %v113 = vmul.f32 %v96, %v112
    %v114 = vsub.f32 %v50, %v113
    %v116 = vperm.slane %v112, 0
    %v118 = vmul.f32 %v77, %v116
    %v120 = vperm.slane %v114, 0
    %v122 = vadd.f32 %v118, %v120
    %v123 = vmax.f32 %v122, 0.0
    %v124 = vld [vmem:[%s4] sm:$0xf]
    %v125 = vld [vmem:[%s4 + $0x4] sm:$0xf]
    %v126 = vld [vmem:[%s4 + $0x8] sm:$0xf]
    %v127 = vld [vmem:[%s4 + $0xc] sm:$0xf]
    %v128 = vld [vmem:[%s4 + $0x10] sm:$0xf]
    %v129 = vld [vmem:[%s4 + $0x14] sm:$0xf]
    %v130 = vld [vmem:[%s4 + $0x18] sm:$0xf]
    %v131 = vld [vmem:[%s4 + $0x1c] sm:$0xf]
    %v132 = vld [vmem:[%s5] sm:$0x1]
    %v133 = vld [vmem:[%s6] sm:$0x1]
    %v134 = vpack.c.bf16 %v123, %v123
    %v143 = vunpack.c.l.b16 %v124
    %v144 = vunpack.c.l.b16 %v125
    %v145 = vunpack.c.l.b16 %v126
    %v146 = vunpack.c.l.b16 %v127
    %v147 = vunpack.c.l.b16 %v128
    %v148 = vunpack.c.l.b16 %v129
    %v149 = vunpack.c.l.b16 %v130
    %v150 = vunpack.c.l.b16 %v131
    %v151 = vpack.c.b16 %v144, %v143
    %v152 = vpack.c.b16 %v146, %v145
    %v153 = vpack.c.b16 %v148, %v147
    %v154 = vpack.c.b16 %v150, %v149
    %v160 = vsel %vm80, %v134, 0
    %162 = vmatpush.bf16.msra.mxu0 0
    %163 = vmatpush.bf16.msra.mxu0 0
    %164 = vmatpush.bf16.msra.mxu0 0
    %165 = vmatpush.bf16.msra.mxu0 0
    %166 = vmatpush.bf16.msra.mxu0 %v154
    %167 = vmatpush.bf16.msra.mxu0 %v153
    %168 = vmatpush.bf16.msra.mxu0 %v152
    %169 = vmatpush.bf16.msra.mxu0 %v151
    %170 = vmatmul.bf16.gmra.mxu0 %v160
    %v171 = vpop.f32.mrf.mxu0
    %v172 = vadd.f32 0.0, %v171
    %v173 = vpop.f32.mrf.mxu0
    %174 = vdwg.mxu0
    %v175 = vsel %vm63, %v172, 0.0
    %v176 = vrot.slane %v175, 4
    %v177 = vadd.f32 %v175, %v176
    %v178 = vrot.slane %v177, 2
    %v179 = vadd.f32 %v177, %v178
    %v180 = vrot.slane %v179, 1
    %v181 = vadd.f32 %v179, %v180
    %v182 = vmul.f32 %v172, %v172
    %v183 = vsel %vm63, %v182, 0.0
    %v184 = vrot.slane %v183, 4
    %v185 = vadd.f32 %v183, %v184
    %v186 = vrot.slane %v185, 2
    %v187 = vadd.f32 %v185, %v186
    %v188 = vrot.slane %v187, 1
    %v189 = vadd.f32 %v187, %v188
    %v190 = vmul.f32 %v181, 0.125
    %v191 = vmul.f32 %v189, 0.125
    %v192 = vmul.f32 %v190, %v190
    %v193 = vsub.f32 %v191, %v192
    %v194 = vmax.f32 %v193, 0.0
    %v195 = vadd.f32 %v194, 1e-05
    %v196 = vrsqrt.pop %v195
    %v197 = vmul.f32 %v196, %v195
    %v198 = vmul.f32 %v197, %v196
    %v199 = vmul.f32 0.5, %v198
    %v200 = vsub.f32 1.5, %v199
    %v201 = vmul.f32 %v196, %v200
    %vm202 = vweird.f32 %v195
    %vm203 = vweird.f32 %v196
    %vm204 = vmor %vm202, %vm203
    %v205 = vsel %vm204, %v196, %v201
    %v206 = vmul.f32 %v132, %v205
    %v207 = vmul.f32 %v190, %v206
    %v208 = vsub.f32 %v133, %v207
    %v210 = vperm.slane %v206, 0
    %v212 = vmul.f32 %v172, %v210
    %v214 = vperm.slane %v208, 0
    %v216 = vadd.f32 %v212, %v214
    %v217 = vmax.f32 %v216, 0.0
    %v218 = vld [vmem:[%s7] sm:$0xf]
    %v219 = vld [vmem:[%s7 + $0x4] sm:$0xf]
    %v220 = vld [vmem:[%s7 + $0x8] sm:$0xf]
    %v221 = vld [vmem:[%s7 + $0xc] sm:$0xf]
    %v222 = vld [vmem:[%s8] sm:$0x1]
    %v223 = vld [vmem:[%s9] sm:$0x1]
    %v224 = vpack.c.bf16 %v217, %v217
    %v229 = vunpack.c.l.b16 %v218
    %v230 = vunpack.c.l.b16 %v219
    %v231 = vunpack.c.l.b16 %v220
    %v232 = vunpack.c.l.b16 %v221
    %v233 = vpack.c.b16 %v230, %v229
    %v234 = vpack.c.b16 %v232, %v231
    %v238 = vsel %vm63, %v224, 0
    %240 = vmatpush.bf16.msra.mxu0 0
    %241 = vmatpush.bf16.msra.mxu0 0
    %242 = vmatpush.bf16.msra.mxu0 0
    %243 = vmatpush.bf16.msra.mxu0 0
    %244 = vmatpush.bf16.msra.mxu0 0
    %245 = vmatpush.bf16.msra.mxu0 0
    %246 = vmatpush.bf16.msra.mxu0 %v234
    %247 = vmatpush.bf16.msra.mxu0 %v233
    %248 = vmatmul.bf16.gmra.mxu0 %v238
    %v249 = vpop.f32.mrf.mxu0
    %v250 = vadd.f32 0.0, %v249
    %v251 = vpop.f32.mrf.mxu0
    %252 = vdwg.mxu0
    %vm253 = vcmask 130048
    %v254 = vsel %vm253, %v250, 0.0
    %v255 = vrot.slane %v254, 4
    %v256 = vadd.f32 %v254, %v255
    %v257 = vrot.slane %v256, 2
    %v258 = vadd.f32 %v256, %v257
    %v259 = vrot.slane %v258, 1
    %v260 = vadd.f32 %v258, %v259
    %v261 = vmul.f32 %v250, %v250
    %v262 = vsel %vm253, %v261, 0.0
    %v263 = vrot.slane %v262, 4
    %v264 = vadd.f32 %v262, %v263
    %v265 = vrot.slane %v264, 2
    %v266 = vadd.f32 %v264, %v265
    %v267 = vrot.slane %v266, 1
    %v268 = vadd.f32 %v266, %v267
    %v269 = vmul.f32 %v260, 0.125
    %v270 = vmul.f32 %v268, 0.125
    %v271 = vmul.f32 %v269, %v269
    %v272 = vsub.f32 %v270, %v271
    %v273 = vmax.f32 %v272, 0.0
    %v274 = vadd.f32 %v273, 1e-05
    %v275 = vrsqrt.pop %v274
    %v276 = vmul.f32 %v275, %v274
    %v277 = vmul.f32 %v276, %v275
    %v278 = vmul.f32 0.5, %v277
    %v279 = vsub.f32 1.5, %v278
    %v280 = vmul.f32 %v275, %v279
    %vm281 = vweird.f32 %v274
    %vm282 = vweird.f32 %v275
    %vm283 = vmor %vm281, %vm282
    %v284 = vsel %vm283, %v275, %v280
    %v285 = vmul.f32 %v222, %v284
    %v286 = vmul.f32 %v269, %v285
    %v287 = vsub.f32 %v223, %v286
    %v289 = vperm.slane %v285, 0
    %v291 = vmul.f32 %v250, %v289
    %v293 = vperm.slane %v287, 0
    %v295 = vadd.f32 %v291, %v293
    %v296 = vmax.f32 %v295, 0.0
    %v297 = vld [vmem:[%s10] sm:$0x1]
    %v298 = vpack.c.bf16 %v296, %v296
    %s299 = sld [smem:[#allocation2]]
    %v300 = vstv %s299
    %v302 = vsel %vm253, %v297, 0
    %v305 = vsel %vm253, %v298, 0
    %307 = vmatpush.bf16.xpose.msra.mxu0 0
    %308 = vmatpush.bf16.xpose.msra.mxu0 0
    %309 = vmatpush.bf16.xpose.msra.mxu0 0
    %310 = vmatpush.bf16.xpose.msra.mxu0 0
    %311 = vmatpush.bf16.xpose.msra.mxu0 0
    %312 = vmatpush.bf16.xpose.msra.mxu0 0
    %313 = vmatpush.bf16.xpose.msra.mxu0 0
    %314 = vmatpush.bf16.xpose.msra.mxu0 %v305
    %315 = vmatmul.bf16.gmra.mxu0 %v302
    %v316 = vpop.f32.mrf.mxu0
    %v317 = vadd.f32 %v300, %v316
    %v318 = vpop.f32.mrf.mxu0
    %319 = vdwg.mxu0
    %vm320 = vcmask 57344
    %321 = vst.msk [vmem:[#allocation3] sm:$0x1] %vm320, %v317
    // Predicated region
    $region50: #{tpu_custom_call.1} parent=1 // pred_check
      _
    $region51: #{tpu_custom_call.1} parent=1 // pred_check_branch
      %323 = sbr.rel (0) target = $region53
    $region52: #{tpu_custom_call.1} parent=1 // pred_region
      %325 = vsyncadd [#allocation4], 0
      %s327 = sshll.u32 [#allocation3], 4
      %s328 = int_to_ptr.vmem [resolvable:$true] %s327
      %s329 = sshll.u32 %s12, 4
      %s330 = int_to_ptr.hbm [resolvable:$true] %s329
      %332 = dma.vmem_to_hbm [thread:$0]  %s328, 16, %s330, [#allocation4]
    $region53: #{tpu_custom_call.1} parent=1 // pred_fallthru
      _
    // Predicated region
    $region54: #{tpu_custom_call.1} parent=1 // pred_check
      _
    $region55: #{tpu_custom_call.1} parent=1 // pred_check_branch
      %334 = sbr.rel (0) target = $region57
    $region56: #{tpu_custom_call.1} parent=1 // pred_region
      %336 = dma.done [#allocation4], 16
    $region57: #{tpu_custom_call.1} parent=1 // pred_fallthru
      _
    %337 = vsyncpa [#allocation4], 1

</llo_original>
